<compile_context>
chip_gen: v5e
topology: v5e:2x2
jax: 0.10.0
libtpu: 0.0.40
codegen_flags: <defaults>
</compile_context>

<pallas_src>
import math
import numpy as np
import jax
import jax.numpy as jnp
from jax import lax
from jax.experimental import pallas as pl
from jax.experimental.pallas import tpu as pltpu

RESL = 4               # initial resolution of G
H = W = RESL
HW = H * W             # 16 pixels per image
KT = 4                 # ConvTranspose2d kernel size
RGB = 3
RGB_PAD = 128          # lane-dense output slab width
LRELU_SLOPE = 0.2
EPS = 1e-8

# small override of resl_to_ch[4] = (512, 512) so the demo stays tiny
C_IN = 32
C_OUT = 32


# ----------------------------------------------------------------------------
# Pallas kernel: whole generator forward for ONE image (grid over batch).
# Layout inside the kernel: pixels-as-rows (HW, C), channels on the lane dim.
# ----------------------------------------------------------------------------
def _g_kernel(z_ref,      # VMEM (1, 1, C_IN)        latent for this image
              wd_ref,     # VMEM (C_IN, HW*C_OUT)    deconv weight (ws0 folded)
              bt_ref,     # VMEM (1, C_OUT)
              mask_ref,   # VMEM (9, HW, 1)          3x3 border masks
              w1_ref,     # VMEM (9*C_OUT, C_OUT)    fused im2col conv weight (ws1 folded)
              b1_ref,     # VMEM (1, C_OUT)
              wrgb_ref,   # VMEM (C_OUT, RGB_PAD)    ToRGB weight, lane-padded (ws2 folded)
              brgb_ref,   # VMEM (1, RGB_PAD)
              out_ref):   # VMEM (HW, RGB_PAD)
    # --- Stage 1: EqualizedLR(ConvTranspose2d(in_c, out_c, 4)) on 1x1 input ---
    # One dense matmul: (1, C_IN) @ (C_IN, HW*C_OUT) -> (1, HW*C_OUT).
    z = z_ref[0]                                                     # (1, C_IN)
    t = jnp.dot(z, wd_ref[...], preferred_element_type=jnp.float32)  # (1, HW*C_OUT)
    # Manual (1, HW*C_OUT) -> (HW, C_OUT): static lane slices + sublane concat.
    h = jnp.concatenate(
        [t[:, s * C_OUT:(s + 1) * C_OUT] for s in range(HW)], axis=0)  # (HW, C_OUT)
    h = h + bt_ref[...]
    # PixelWiseNorm (mean of x^2 over channels == lane dim) + LeakyReLU(0.2)
    h = h * lax.rsqrt(jnp.mean(h * h, axis=-1, keepdims=True) + EPS)
    h = jnp.where(h >= 0, h, LRELU_SLOPE * h)

    # --- Stage 2: EqualizedLR(Conv2d(out_c, out_c, 3, pad=1)) ---------------
    # im2col: 9 statically-rotated, border-masked copies concatenated on lanes,
    # then ONE fused matmul with K = 9*C_OUT.
    cols = []
    for k in range(9):
        dy, dx = k // 3 - 1, k % 3 - 1
        delta = dy * W + dx                      # row offset of the neighbor pixel
        tsh = delta % HW
        if tsh == 0:
            sh = h
        else:
            sh = jnp.concatenate([h[tsh:, :], h[:tsh, :]], axis=0)   # sh[s] = h[s+delta]
        cols.append(sh * mask_ref[k])            # zero the out-of-image taps
    col = jnp.concatenate(cols, axis=-1)         # (HW, 9*C_OUT)
    a = jnp.dot(col, w1_ref[...], preferred_element_type=jnp.float32) + b1_ref[...]
    h2 = a * lax.rsqrt(jnp.mean(a * a, axis=-1, keepdims=True) + EPS)
    h2 = jnp.where(h2 >= 0, h2, LRELU_SLOPE * h2)

    # --- Stage 3: ToRGB = EqualizedLR(Conv2d(out_c, 3, 1)) + Tanh -----------
    # Weight is lane-padded to 128 so the final store is lane-dense (no vst.msk).
    rgb = jnp.dot(h2, wrgb_ref[...], preferred_element_type=jnp.float32) + brgb_ref[...]
    out_ref[...] = jnp.tanh(rgb)


# ----------------------------------------------------------------------------
# Parameter setup (deterministic, mirrors EqualizedLR.__init__ semantics).
# ----------------------------------------------------------------------------
def _kaiming_normal(key, shape, fan_in):
    std = math.sqrt(2.0 / fan_in)          # gain for 'relu'
    return jax.random.normal(key, shape, dtype=jnp.float32) * std


def init_params(key):
    k1, k2, k3 = jax.random.split(key, 3)
    # ConvTranspose2d weight: (in_c, out_c, 4, 4); torch fan_in = out_c*4*4
    wt_raw = _kaiming_normal(k1, (C_IN, C_OUT, KT, KT), C_OUT * KT * KT)
    ws0 = jnp.sqrt(jnp.mean(wt_raw ** 2))
    wt = wt_raw / ws0
    # Conv2d weight: (out_c, out_c, 3, 3); fan_in = out_c*9
    w1_raw = _kaiming_normal(k2, (C_OUT, C_OUT, 3, 3), C_OUT * 9)
    ws1 = jnp.sqrt(jnp.mean(w1_raw ** 2))
    w1 = w1_raw / ws1
    # ToRGB Conv2d weight: (3, out_c, 1, 1); fan_in = out_c
    wrgb_raw = _kaiming_normal(k3, (RGB, C_OUT, 1, 1), C_OUT)
    ws2 = jnp.sqrt(jnp.mean(wrgb_raw ** 2))
    wrgb = wrgb_raw / ws2
    return dict(
        wt=wt, bt=jnp.zeros((C_OUT,), jnp.float32),
        w1=w1, b1=jnp.zeros((C_OUT,), jnp.float32),
        wrgb=wrgb, brgb=jnp.zeros((RGB,), jnp.float32),
        wscales=jnp.stack([ws0, ws1, ws2]).astype(jnp.float32),
    )


def _build_tap_masks():
    """(9, HW, 1) f32 masks: 1 where the 3x3 tap stays inside the image."""
    idx = np.arange(HW)
    y, x = idx // W, idx % W
    m = np.zeros((9, HW, 1), np.float32)
    for k in range(9):
        dy, dx = k // 3 - 1, k % 3 - 1
        valid = (y + dy >= 0) & (y + dy < H) & (x + dx >= 0) & (x + dx < W)
        m[k, :, 0] = valid.astype(np.float32)
    return jnp.asarray(m)


# ----------------------------------------------------------------------------
# Wrapper: weight re-layout (wscales folded in) + pallas_call.
# ----------------------------------------------------------------------------
def g_forward(x_nchw, params, phase="stabilization"):
    assert phase == "stabilization"  # initial G has no rgb_l / transition path
    B, cin, hh, ww = x_nchw.shape
    assert (cin, hh, ww) == (C_IN, 1, 1)
    ws0, ws1, ws2 = params["wscales"][0], params["wscales"][1], params["wscales"][2]

    # latent, one (1, C_IN) row per image
    z3 = x_nchw[:, :, 0, 0].astype(jnp.float32).reshape(B, 1, C_IN)

    # Stage-1 weight: wd[i, (y*W+x)*C_OUT + o] = ws0 * Wt[i, o, y, x]
    wd = jnp.transpose(params["wt"], (0, 2, 3, 1)).reshape(C_IN, HW * C_OUT) * ws0
    bt2 = params["bt"].reshape(1, C_OUT)
    # Stage-2 fused im2col weight: w1cat[(ky*3+kx)*C + i, o] = ws1 * W1[o, i, ky, kx]
    w1cat = jnp.transpose(params["w1"], (2, 3, 1, 0)).reshape(9 * C_OUT, C_OUT) * ws1
    b12 = params["b1"].reshape(1, C_OUT)
    # ToRGB, lane-padded to 128: wrgb_pad[i, r] = ws2 * Wrgb[r, i] for r < 3
    wrgb2 = params["wrgb"][:, :, 0, 0].T * ws2                       # (C_OUT, RGB)
    wrgb_pad = jnp.zeros((C_OUT, RGB_PAD), jnp.float32).at[:, :RGB].set(wrgb2)
    brgb_pad = jnp.zeros((1, RGB_PAD), jnp.float32).at[0, :RGB].set(params["brgb"])
    masks = _build_tap_masks()                                       # (9, HW, 1)

    const2 = lambda b: (0, 0)
    const3 = lambda b: (0, 0, 0)

    out = pl.pallas_call(
        _g_kernel,
        out_shape=jax.ShapeDtypeStruct((B * HW, RGB_PAD), jnp.float32),
        grid=(B,),
        in_specs=[
            pl.BlockSpec((1, 1, C_IN), lambda b: (b, 0, 0)),     # z (per image)
            pl.BlockSpec((C_IN, HW * C_OUT), const2),            # wd   (resident)
            pl.BlockSpec((1, C_OUT), const2),                    # bt
            pl.BlockSpec((9, HW, 1), const3),                    # masks
            pl.BlockSpec((9 * C_OUT, C_OUT), const2),            # w1cat
            pl.BlockSpec((1, C_OUT), const2),                    # b1
            pl.BlockSpec((C_OUT, RGB_PAD), const2),              # wrgb (padded)
            pl.BlockSpec((1, RGB_PAD), const2),                  # brgb (padded)
        ],
        out_specs=pl.BlockSpec((HW, RGB_PAD), lambda b: (b, 0)),
        compiler_params=pltpu.CompilerParams(
            dimension_semantics=("parallel",)),
    )(z3, wd, bt2, masks, w1cat, b12, wrgb_pad, brgb_pad)

    # (B*HW, 128) -> NCHW, keeping only the 3 real RGB lanes
    return out.reshape(B, H, W, RGB_PAD)[..., :RGB].transpose(0, 3, 1, 2)


# ----------------------------------------------------------------------------
# Pure-JAX reference (mirrors the PyTorch module) for a correctness check.
# ----------------------------------------------------------------------------
def _pixelnorm(x):
    return x * lax.rsqrt(jnp.mean(x * x, axis=1, keepdims=True) + EPS)


def _lrelu(x):
    return jnp.where(x >= 0, x, LRELU_SLOPE * x)


def g_forward_reference(x_nchw, p):
    ws0, ws1, ws2 = p["wscales"]
    # ConvTranspose2d(4) on 1x1 input
    h = jnp.einsum("bi,iohw->bohw", (x_nchw * ws0)[:, :, 0, 0], p["wt"]) \
        + p["bt"][None, :, None, None]
    h = _lrelu(_pixelnorm(h))
    # Conv2d 3x3, padding=1
    h = lax.conv_general_dilated(h * ws1, p["w1"], (1, 1), ((1, 1), (1, 1)),
                                 dimension_numbers=("NCHW", "OIHW", "NCHW")) \
        + p["b1"][None, :, None, None]
    h = _lrelu(_pixelnorm(h))
    # ToRGB 1x1 + tanh
    r = lax.conv_general_dilated(h * ws2, p["wrgb"], (1, 1), ((0, 0), (0, 0)),
                                 dimension_numbers=("NCHW", "OIHW", "NCHW")) \
        + p["brgb"][None, :, None, None]
    return jnp.tanh(r)


if __name__ == "__main__":
    key = jax.random.PRNGKey(0)
    kx, kp = jax.random.split(key)
    params = init_params(kp)

    B = 2
    x = jax.random.normal(kx, (B, C_IN, 1, 1), dtype=jnp.float32)

    out = g_forward(x, params, phase="stabilization")
    out = jax.block_until_ready(out)
    assert out.shape == (B, RGB, H, W), out.shape

    ref = jax.block_until_ready(g_forward_reference(x, params))
    np.testing.assert_allclose(np.asarray(out), np.asarray(ref),
                               rtol=1e-3, atol=1e-3)
    print("KERNEL_OK")
</pallas_src>

<mosaic_0001>
module attributes {stable_mosaic.version = 11 : i64} {
  func.func @_g_kernel(%arg0: i32, %arg1: memref<1x1x32xf32, #tpu.memory_space<vmem>>, %arg2: memref<32x512xf32, #tpu.memory_space<vmem>>, %arg3: memref<1x32xf32, #tpu.memory_space<vmem>>, %arg4: memref<9x16x1xf32, #tpu.memory_space<vmem>>, %arg5: memref<288x32xf32, #tpu.memory_space<vmem>>, %arg6: memref<1x32xf32, #tpu.memory_space<vmem>>, %arg7: memref<32x128xf32, #tpu.memory_space<vmem>>, %arg8: memref<1x128xf32, #tpu.memory_space<vmem>>, %arg9: memref<16x128xf32, #tpu.memory_space<vmem>>) attributes {dimension_semantics = [#tpu.dimension_semantics<parallel>], iteration_bounds = array<i64: 2>, scalar_prefetch = 0 : i64, scratch_operands = 0 : i64, tpu.core_type = #tpu.core_type<tc>, window_params = [{transform_indices = @transform_0, window_bounds = array<i64: 1, 1, 32>}, {pipeline_mode = #tpu.pipeline_mode<synchronous>, transform_indices = @transform_1, window_bounds = array<i64: 32, 512>}, {pipeline_mode = #tpu.pipeline_mode<synchronous>, transform_indices = @transform_2, window_bounds = array<i64: 1, 32>}, {pipeline_mode = #tpu.pipeline_mode<synchronous>, transform_indices = @transform_3, window_bounds = array<i64: 9, 16, 1>}, {pipeline_mode = #tpu.pipeline_mode<synchronous>, transform_indices = @transform_4, window_bounds = array<i64: 288, 32>}, {pipeline_mode = #tpu.pipeline_mode<synchronous>, transform_indices = @transform_5, window_bounds = array<i64: 1, 32>}, {pipeline_mode = #tpu.pipeline_mode<synchronous>, transform_indices = @transform_6, window_bounds = array<i64: 32, 128>}, {pipeline_mode = #tpu.pipeline_mode<synchronous>, transform_indices = @transform_7, window_bounds = array<i64: 1, 128>}, {transform_indices = @transform_8, window_bounds = array<i64: 16, 128>}]} {
    %c0 = arith.constant 0 : index
    %c0_0 = arith.constant 0 : index
    %c0_1 = arith.constant 0 : index
    %0 = vector.load %arg1[%c0, %c0_0, %c0_1] : memref<1x1x32xf32, #tpu.memory_space<vmem>>, vector<1x1x32xf32>
    %1 = vector.shape_cast %0 : vector<1x1x32xf32> to vector<1x32xf32>
    %c0_2 = arith.constant 0 : index
    %c0_3 = arith.constant 0 : index
    %2 = vector.load %arg2[%c0_2, %c0_3] : memref<32x512xf32, #tpu.memory_space<vmem>>, vector<32x512xf32>
    %cst = arith.constant dense<0.000000e+00> : vector<1x512xf32>
    %3 = tpu.matmul %1, %2, %cst {dimension_numbers = #tpu.dot_dimension_numbers<[1], [0], [0], [1], [0, 0, 1, 1], [], []>} : vector<1x32xf32>, vector<32x512xf32>, vector<1x512xf32> -> vector<1x512xf32>
    %4 = vector.extract_strided_slice %3 {offsets = [0, 0], sizes = [1, 32], strides = [1, 1]} : vector<1x512xf32> to vector<1x32xf32>
    %5 = vector.extract_strided_slice %3 {offsets = [0, 32], sizes = [1, 32], strides = [1, 1]} : vector<1x512xf32> to vector<1x32xf32>
    %6 = vector.extract_strided_slice %3 {offsets = [0, 64], sizes = [1, 32], strides = [1, 1]} : vector<1x512xf32> to vector<1x32xf32>
    %7 = vector.extract_strided_slice %3 {offsets = [0, 96], sizes = [1, 32], strides = [1, 1]} : vector<1x512xf32> to vector<1x32xf32>
    %8 = vector.extract_strided_slice %3 {offsets = [0, 128], sizes = [1, 32], strides = [1, 1]} : vector<1x512xf32> to vector<1x32xf32>
    %9 = vector.extract_strided_slice %3 {offsets = [0, 160], sizes = [1, 32], strides = [1, 1]} : vector<1x512xf32> to vector<1x32xf32>
    %10 = vector.extract_strided_slice %3 {offsets = [0, 192], sizes = [1, 32], strides = [1, 1]} : vector<1x512xf32> to vector<1x32xf32>
    %11 = vector.extract_strided_slice %3 {offsets = [0, 224], sizes = [1, 32], strides = [1, 1]} : vector<1x512xf32> to vector<1x32xf32>
    %12 = vector.extract_strided_slice %3 {offsets = [0, 256], sizes = [1, 32], strides = [1, 1]} : vector<1x512xf32> to vector<1x32xf32>
    %13 = vector.extract_strided_slice %3 {offsets = [0, 288], sizes = [1, 32], strides = [1, 1]} : vector<1x512xf32> to vector<1x32xf32>
    %14 = vector.extract_strided_slice %3 {offsets = [0, 320], sizes = [1, 32], strides = [1, 1]} : vector<1x512xf32> to vector<1x32xf32>
    %15 = vector.extract_strided_slice %3 {offsets = [0, 352], sizes = [1, 32], strides = [1, 1]} : vector<1x512xf32> to vector<1x32xf32>
    %16 = vector.extract_strided_slice %3 {offsets = [0, 384], sizes = [1, 32], strides = [1, 1]} : vector<1x512xf32> to vector<1x32xf32>
    %17 = vector.extract_strided_slice %3 {offsets = [0, 416], sizes = [1, 32], strides = [1, 1]} : vector<1x512xf32> to vector<1x32xf32>
    %18 = vector.extract_strided_slice %3 {offsets = [0, 448], sizes = [1, 32], strides = [1, 1]} : vector<1x512xf32> to vector<1x32xf32>
    %19 = vector.extract_strided_slice %3 {offsets = [0, 480], sizes = [1, 32], strides = [1, 1]} : vector<1x512xf32> to vector<1x32xf32>
    %20 = tpu.concatenate %4, %5, %6, %7, %8, %9, %10, %11, %12, %13, %14, %15, %16, %17, %18, %19 in 0 : vector<1x32xf32>, vector<1x32xf32>, vector<1x32xf32>, vector<1x32xf32>, vector<1x32xf32>, vector<1x32xf32>, vector<1x32xf32>, vector<1x32xf32>, vector<1x32xf32>, vector<1x32xf32>, vector<1x32xf32>, vector<1x32xf32>, vector<1x32xf32>, vector<1x32xf32>, vector<1x32xf32>, vector<1x32xf32> -> vector<16x32xf32>
    %c0_4 = arith.constant 0 : index
    %c0_5 = arith.constant 0 : index
    %21 = vector.load %arg3[%c0_4, %c0_5] : memref<1x32xf32, #tpu.memory_space<vmem>>, vector<1x32xf32>
    %22 = vector.broadcast %21 : vector<1x32xf32> to vector<16x32xf32>
    %23 = arith.addf %20, %22 : vector<16x32xf32>
    %24 = arith.mulf %23, %23 : vector<16x32xf32>
    %cst_6 = arith.constant dense<0.000000e+00> : vector<16xf32>
    %25 = vector.multi_reduction <add>, %24, %cst_6 [1] : vector<16x32xf32> to vector<16xf32>
    %26 = vector.shape_cast %25 : vector<16xf32> to vector<16x1xf32>
    %cst_7 = arith.constant 3.200000e+01 : f32
    %27 = vector.broadcast %cst_7 : f32 to vector<16x1xf32>
    %28 = arith.divf %26, %27 : vector<16x1xf32>
    %cst_8 = arith.constant 9.99999993E-9 : f32
    %29 = vector.broadcast %cst_8 : f32 to vector<16x1xf32>
    %30 = arith.addf %28, %29 : vector<16x1xf32>
    %31 = math.rsqrt %30 : vector<16x1xf32>
    %32 = vector.broadcast %31 : vector<16x1xf32> to vector<16x32xf32>
    %33 = arith.mulf %23, %32 : vector<16x32xf32>
    %cst_9 = arith.constant 0.000000e+00 : f32
    %34 = vector.broadcast %cst_9 : f32 to vector<16x32xf32>
    %35 = arith.cmpf oge, %33, %34 : vector<16x32xf32>
    %cst_10 = arith.constant 2.000000e-01 : f32
    %36 = vector.broadcast %cst_10 : f32 to vector<16x32xf32>
    %37 = arith.mulf %36, %33 : vector<16x32xf32>
    %38 = arith.select %35, %33, %37 : vector<16x32xi1>, vector<16x32xf32>
    %39 = vector.extract_strided_slice %38 {offsets = [11, 0], sizes = [5, 32], strides = [1, 1]} : vector<16x32xf32> to vector<5x32xf32>
    %40 = vector.extract_strided_slice %38 {offsets = [0, 0], sizes = [11, 32], strides = [1, 1]} : vector<16x32xf32> to vector<11x32xf32>
    %41 = tpu.concatenate %39, %40 in 0 : vector<5x32xf32>, vector<11x32xf32> -> vector<16x32xf32>
    %c0_11 = arith.constant 0 : index
    %c0_12 = arith.constant 0 : index
    %c0_13 = arith.constant 0 : index
    %42 = vector.load %arg4[%c0_11, %c0_12, %c0_13] : memref<9x16x1xf32, #tpu.memory_space<vmem>>, vector<1x16x1xf32>
    %43 = vector.shape_cast %42 : vector<1x16x1xf32> to vector<16x1xf32>
    %44 = vector.broadcast %43 : vector<16x1xf32> to vector<16x32xf32>
    %45 = arith.mulf %41, %44 : vector<16x32xf32>
    %46 = vector.extract_strided_slice %38 {offsets = [12, 0], sizes = [4, 32], strides = [1, 1]} : vector<16x32xf32> to vector<4x32xf32>
    %47 = vector.extract_strided_slice %38 {offsets = [0, 0], sizes = [12, 32], strides = [1, 1]} : vector<16x32xf32> to vector<12x32xf32>
    %48 = tpu.concatenate %46, %47 in 0 : vector<4x32xf32>, vector<12x32xf32> -> vector<16x32xf32>
    %c1 = arith.constant 1 : index
    %c0_14 = arith.constant 0 : index
    %c0_15 = arith.constant 0 : index
    %49 = vector.load %arg4[%c1, %c0_14, %c0_15] : memref<9x16x1xf32, #tpu.memory_space<vmem>>, vector<1x16x1xf32>
    %50 = vector.shape_cast %49 : vector<1x16x1xf32> to vector<16x1xf32>
    %51 = vector.broadcast %50 : vector<16x1xf32> to vector<16x32xf32>
    %52 = arith.mulf %48, %51 : vector<16x32xf32>
    %53 = vector.extract_strided_slice %38 {offsets = [13, 0], sizes = [3, 32], strides = [1, 1]} : vector<16x32xf32> to vector<3x32xf32>
    %54 = vector.extract_strided_slice %38 {offsets = [0, 0], sizes = [13, 32], strides = [1, 1]} : vector<16x32xf32> to vector<13x32xf32>
    %55 = tpu.concatenate %53, %54 in 0 : vector<3x32xf32>, vector<13x32xf32> -> vector<16x32xf32>
    %c2 = arith.constant 2 : index
    %c0_16 = arith.constant 0 : index
    %c0_17 = arith.constant 0 : index
    %56 = vector.load %arg4[%c2, %c0_16, %c0_17] : memref<9x16x1xf32, #tpu.memory_space<vmem>>, vector<1x16x1xf32>
    %57 = vector.shape_cast %56 : vector<1x16x1xf32> to vector<16x1xf32>
    %58 = vector.broadcast %57 : vector<16x1xf32> to vector<16x32xf32>
    %59 = arith.mulf %55, %58 : vector<16x32xf32>
    %60 = vector.extract_strided_slice %38 {offsets = [15, 0], sizes = [1, 32], strides = [1, 1]} : vector<16x32xf32> to vector<1x32xf32>
    %61 = vector.extract_strided_slice %38 {offsets = [0, 0], sizes = [15, 32], strides = [1, 1]} : vector<16x32xf32> to vector<15x32xf32>
    %62 = tpu.concatenate %60, %61 in 0 : vector<1x32xf32>, vector<15x32xf32> -> vector<16x32xf32>
    %c3 = arith.constant 3 : index
    %c0_18 = arith.constant 0 : index
    %c0_19 = arith.constant 0 : index
    %63 = vector.load %arg4[%c3, %c0_18, %c0_19] : memref<9x16x1xf32, #tpu.memory_space<vmem>>, vector<1x16x1xf32>
    %64 = vector.shape_cast %63 : vector<1x16x1xf32> to vector<16x1xf32>
    %65 = vector.broadcast %64 : vector<16x1xf32> to vector<16x32xf32>
    %66 = arith.mulf %62, %65 : vector<16x32xf32>
    %c4 = arith.constant 4 : index
    %c0_20 = arith.constant 0 : index
    %c0_21 = arith.constant 0 : index
    %67 = vector.load %arg4[%c4, %c0_20, %c0_21] : memref<9x16x1xf32, #tpu.memory_space<vmem>>, vector<1x16x1xf32>
    %68 = vector.shape_cast %67 : vector<1x16x1xf32> to vector<16x1xf32>
    %69 = vector.broadcast %68 : vector<16x1xf32> to vector<16x32xf32>
    %70 = arith.mulf %38, %69 : vector<16x32xf32>
    %71 = vector.extract_strided_slice %38 {offsets = [1, 0], sizes = [15, 32], strides = [1, 1]} : vector<16x32xf32> to vector<15x32xf32>
    %72 = vector.extract_strided_slice %38 {offsets = [0, 0], sizes = [1, 32], strides = [1, 1]} : vector<16x32xf32> to vector<1x32xf32>
    %73 = tpu.concatenate %71, %72 in 0 : vector<15x32xf32>, vector<1x32xf32> -> vector<16x32xf32>
    %c5 = arith.constant 5 : index
    %c0_22 = arith.constant 0 : index
    %c0_23 = arith.constant 0 : index
    %74 = vector.load %arg4[%c5, %c0_22, %c0_23] : memref<9x16x1xf32, #tpu.memory_space<vmem>>, vector<1x16x1xf32>
    %75 = vector.shape_cast %74 : vector<1x16x1xf32> to vector<16x1xf32>
    %76 = vector.broadcast %75 : vector<16x1xf32> to vector<16x32xf32>
    %77 = arith.mulf %73, %76 : vector<16x32xf32>
    %78 = vector.extract_strided_slice %38 {offsets = [3, 0], sizes = [13, 32], strides = [1, 1]} : vector<16x32xf32> to vector<13x32xf32>
    %79 = vector.extract_strided_slice %38 {offsets = [0, 0], sizes = [3, 32], strides = [1, 1]} : vector<16x32xf32> to vector<3x32xf32>
    %80 = tpu.concatenate %78, %79 in 0 : vector<13x32xf32>, vector<3x32xf32> -> vector<16x32xf32>
    %c6 = arith.constant 6 : index
    %c0_24 = arith.constant 0 : index
    %c0_25 = arith.constant 0 : index
    %81 = vector.load %arg4[%c6, %c0_24, %c0_25] : memref<9x16x1xf32, #tpu.memory_space<vmem>>, vector<1x16x1xf32>
    %82 = vector.shape_cast %81 : vector<1x16x1xf32> to vector<16x1xf32>
    %83 = vector.broadcast %82 : vector<16x1xf32> to vector<16x32xf32>
    %84 = arith.mulf %80, %83 : vector<16x32xf32>
    %85 = vector.extract_strided_slice %38 {offsets = [4, 0], sizes = [12, 32], strides = [1, 1]} : vector<16x32xf32> to vector<12x32xf32>
    %86 = vector.extract_strided_slice %38 {offsets = [0, 0], sizes = [4, 32], strides = [1, 1]} : vector<16x32xf32> to vector<4x32xf32>
    %87 = tpu.concatenate %85, %86 in 0 : vector<12x32xf32>, vector<4x32xf32> -> vector<16x32xf32>
    %c7 = arith.constant 7 : index
    %c0_26 = arith.constant 0 : index
    %c0_27 = arith.constant 0 : index
    %88 = vector.load %arg4[%c7, %c0_26, %c0_27] : memref<9x16x1xf32, #tpu.memory_space<vmem>>, vector<1x16x1xf32>
    %89 = vector.shape_cast %88 : vector<1x16x1xf32> to vector<16x1xf32>
    %90 = vector.broadcast %89 : vector<16x1xf32> to vector<16x32xf32>
    %91 = arith.mulf %87, %90 : vector<16x32xf32>
    %92 = vector.extract_strided_slice %38 {offsets = [5, 0], sizes = [11, 32], strides = [1, 1]} : vector<16x32xf32> to vector<11x32xf32>
    %93 = vector.extract_strided_slice %38 {offsets = [0, 0], sizes = [5, 32], strides = [1, 1]} : vector<16x32xf32> to vector<5x32xf32>
    %94 = tpu.concatenate %92, %93 in 0 : vector<11x32xf32>, vector<5x32xf32> -> vector<16x32xf32>
    %c8 = arith.constant 8 : index
    %c0_28 = arith.constant 0 : index
    %c0_29 = arith.constant 0 : index
    %95 = vector.load %arg4[%c8, %c0_28, %c0_29] : memref<9x16x1xf32, #tpu.memory_space<vmem>>, vector<1x16x1xf32>
    %96 = vector.shape_cast %95 : vector<1x16x1xf32> to vector<16x1xf32>
    %97 = vector.broadcast %96 : vector<16x1xf32> to vector<16x32xf32>
    %98 = arith.mulf %94, %97 : vector<16x32xf32>
    %99 = tpu.concatenate %45, %52, %59, %66, %70, %77, %84, %91, %98 in 1 : vector<16x32xf32>, vector<16x32xf32>, vector<16x32xf32>, vector<16x32xf32>, vector<16x32xf32>, vector<16x32xf32>, vector<16x32xf32>, vector<16x32xf32>, vector<16x32xf32> -> vector<16x288xf32>
    %c0_30 = arith.constant 0 : index
    %c0_31 = arith.constant 0 : index
    %100 = vector.load %arg5[%c0_30, %c0_31] : memref<288x32xf32, #tpu.memory_space<vmem>>, vector<288x32xf32>
    %cst_32 = arith.constant dense<0.000000e+00> : vector<16x32xf32>
    %101 = tpu.matmul %99, %100, %cst_32 {dimension_numbers = #tpu.dot_dimension_numbers<[1], [0], [0], [1], [0, 0, 1, 1], [], []>} : vector<16x288xf32>, vector<288x32xf32>, vector<16x32xf32> -> vector<16x32xf32>
    %c0_33 = arith.constant 0 : index
    %c0_34 = arith.constant 0 : index
    %102 = vector.load %arg6[%c0_33, %c0_34] : memref<1x32xf32, #tpu.memory_space<vmem>>, vector<1x32xf32>
    %103 = vector.broadcast %102 : vector<1x32xf32> to vector<16x32xf32>
    %104 = arith.addf %101, %103 : vector<16x32xf32>
    %105 = arith.mulf %104, %104 : vector<16x32xf32>
    %cst_35 = arith.constant dense<0.000000e+00> : vector<16xf32>
    %106 = vector.multi_reduction <add>, %105, %cst_35 [1] : vector<16x32xf32> to vector<16xf32>
    %107 = vector.shape_cast %106 : vector<16xf32> to vector<16x1xf32>
    %cst_36 = arith.constant 3.200000e+01 : f32
    %108 = vector.broadcast %cst_36 : f32 to vector<16x1xf32>
    %109 = arith.divf %107, %108 : vector<16x1xf32>
    %cst_37 = arith.constant 9.99999993E-9 : f32
    %110 = vector.broadcast %cst_37 : f32 to vector<16x1xf32>
    %111 = arith.addf %109, %110 : vector<16x1xf32>
    %112 = math.rsqrt %111 : vector<16x1xf32>
    %113 = vector.broadcast %112 : vector<16x1xf32> to vector<16x32xf32>
    %114 = arith.mulf %104, %113 : vector<16x32xf32>
    %cst_38 = arith.constant 0.000000e+00 : f32
    %115 = vector.broadcast %cst_38 : f32 to vector<16x32xf32>
    %116 = arith.cmpf oge, %114, %115 : vector<16x32xf32>
    %cst_39 = arith.constant 2.000000e-01 : f32
    %117 = vector.broadcast %cst_39 : f32 to vector<16x32xf32>
    %118 = arith.mulf %117, %114 : vector<16x32xf32>
    %119 = arith.select %116, %114, %118 : vector<16x32xi1>, vector<16x32xf32>
    %c0_40 = arith.constant 0 : index
    %c0_41 = arith.constant 0 : index
    %120 = vector.load %arg7[%c0_40, %c0_41] : memref<32x128xf32, #tpu.memory_space<vmem>>, vector<32x128xf32>
    %cst_42 = arith.constant dense<0.000000e+00> : vector<16x128xf32>
    %121 = tpu.matmul %119, %120, %cst_42 {dimension_numbers = #tpu.dot_dimension_numbers<[1], [0], [0], [1], [0, 0, 1, 1], [], []>} : vector<16x32xf32>, vector<32x128xf32>, vector<16x128xf32> -> vector<16x128xf32>
    %c0_43 = arith.constant 0 : index
    %c0_44 = arith.constant 0 : index
    %122 = vector.load %arg8[%c0_43, %c0_44] : memref<1x128xf32, #tpu.memory_space<vmem>>, vector<1x128xf32>
    %123 = vector.broadcast %122 : vector<1x128xf32> to vector<16x128xf32>
    %124 = arith.addf %121, %123 : vector<16x128xf32>
    %125 = math.tanh %124 : vector<16x128xf32>
    %c0_45 = arith.constant 0 : index
    %c0_46 = arith.constant 0 : index
    %126 = vector.load %arg9[%c0_45, %c0_46] : memref<16x128xf32, #tpu.memory_space<vmem>>, vector<16x128xf32>
    tpu.vector_store %arg9[%c0_45, %c0_46], %125 {strides = array<i32>} : memref<16x128xf32, #tpu.memory_space<vmem>>, vector<16x128xf32>,
    return
  }
  func.func @transform_0(%arg0: i32) -> (i32, i32, i32) {
    %c0_i32 = arith.constant 0 : i32
    %c0_i32_0 = arith.constant 0 : i32
    %c0_i32_1 = arith.constant 0 : i32
    return %arg0, %c0_i32, %c0_i32_0 : i32, i32, i32
  }
  func.func @transform_1(%arg0: i32) -> (i32, i32) {
    %c0_i32 = arith.constant 0 : i32
    %c0_i32_0 = arith.constant 0 : i32
    %c0_i32_1 = arith.constant 0 : i32
    return %c0_i32, %c0_i32_0 : i32, i32
  }
  func.func @transform_2(%arg0: i32) -> (i32, i32) {
    %c0_i32 = arith.constant 0 : i32
    %c0_i32_0 = arith.constant 0 : i32
    %c0_i32_1 = arith.constant 0 : i32
    return %c0_i32, %c0_i32_0 : i32, i32
  }
  func.func @transform_3(%arg0: i32) -> (i32, i32, i32) {
    %c0_i32 = arith.constant 0 : i32
    %c0_i32_0 = arith.constant 0 : i32
    %c0_i32_1 = arith.constant 0 : i32
    %c0_i32_2 = arith.constant 0 : i32
    return %c0_i32, %c0_i32_0, %c0_i32_1 : i32, i32, i32
  }
  func.func @transform_4(%arg0: i32) -> (i32, i32) {
    %c0_i32 = arith.constant 0 : i32
    %c0_i32_0 = arith.constant 0 : i32
    %c0_i32_1 = arith.constant 0 : i32
    return %c0_i32, %c0_i32_0 : i32, i32
  }
  func.func @transform_5(%arg0: i32) -> (i32, i32) {
    %c0_i32 = arith.constant 0 : i32
    %c0_i32_0 = arith.constant 0 : i32
    %c0_i32_1 = arith.constant 0 : i32
    return %c0_i32, %c0_i32_0 : i32, i32
  }
  func.func @transform_6(%arg0: i32) -> (i32, i32) {
    %c0_i32 = arith.constant 0 : i32
    %c0_i32_0 = arith.constant 0 : i32
    %c0_i32_1 = arith.constant 0 : i32
    return %c0_i32, %c0_i32_0 : i32, i32
  }
  func.func @transform_7(%arg0: i32) -> (i32, i32) {
    %c0_i32 = arith.constant 0 : i32
    %c0_i32_0 = arith.constant 0 : i32
    %c0_i32_1 = arith.constant 0 : i32
    return %c0_i32, %c0_i32_0 : i32, i32
  }
  func.func @transform_8(%arg0: i32) -> (i32, i32) {
    %c0_i32 = arith.constant 0 : i32
    %c0_i32_0 = arith.constant 0 : i32
    return %arg0, %c0_i32 : i32, i32
  }
}

</mosaic_0001>

<llo_original>
// kernel: tpu_custom_call.1
$region0: #{tpu_custom_call.1}
  #allocation0 [shape = 'u32[]', space=smem, size = 0x4, offset = 0x4, fixed_abs, tag = 'smem constant byte address 0x4 - core index']
  #allocation1 [shape = 'u32[72,128]{1,0:T(1,128)}', space=vmem, size = 0x9000, scoped, tag = 'internal scratch']
  %s0 = inlined_call_operand.vmem [shape: f32[2,1,32], index: 0, kind: input, shape index: {}]
  %s1 = inlined_call_operand.vmem [shape: f32[32,512], index: 1, kind: input, shape index: {}]
  %s2 = inlined_call_operand.vmem [shape: f32[1,32], index: 2, kind: input, shape index: {}]
  %s3 = inlined_call_operand.vmem [shape: f32[9,16,1], index: 3, kind: input, shape index: {}]
  %s4 = inlined_call_operand.vmem [shape: f32[288,32], index: 4, kind: input, shape index: {}]
  %s5 = inlined_call_operand.vmem [shape: f32[1,32], index: 5, kind: input, shape index: {}]
  %s6 = inlined_call_operand.vmem [shape: f32[32,128], index: 6, kind: input, shape index: {}]
  %s7 = inlined_call_operand.vmem [shape: f32[1,128], index: 7, kind: input, shape index: {}]
  %s8 = inlined_call_operand.hbm [shape: f32[32,128], index: 8, kind: output, shape index: {}]
  %s9 = sld [smem:[#allocation0]]
  $region65: #{tpu_custom_call.1} parent=0
    _
  %s11 = ssub.s32 1, %s9
  %s12 = scalar_select 0, %s11, %s9
  $region1: #{tpu_custom_call.1} parent=0
    #allocation2 [shape = 'u8[16384]{0}', space=vmem, size = 0x4000, scoped, tag = 'output window, operand 0']
    #allocation3 [shape = 's32[2]{0}', space=sflag, size = 0x8, scoped, tag = 'scoped memory for tpu_custom_call.1']
    %13 = vsyncpa [#allocation3], 0
    %s14 = scalar_lea.sflag [#allocation3], 1
    %15 = vsyncpa %s14, 0
    loop: start=0, step=1, limit=4
    $region2: #{tpu_custom_call.1} parent=1 // loop_pre_header
      _
    $region3: #{tpu_custom_call.1} parent=1 // loop_header
      %s17 = sphi 0, %s21
      %p18 = scmp.ge.s32.totalorder %s17, 4
      %s27 = sphi 0, %s29
      %s30 = sphi 0, %s27
      %s31 = sphi 0, %s30
      %s47 = sphi 0, %s31
      %s51 = sphi 0, %s51
      %s53 = sphi 0, %s51
      %s54 = sphi 0, %s53
      %s68 = sphi 0, %s54
      %s72 = sphi 0, %s72
      %s74 = sphi 0, %s72
      %s75 = sphi 0, %s74
      %s89 = sphi 0, %s75
      %s93 = sphi 0, %s93
      %s95 = sphi 0, %s93
      %s96 = sphi 0, %s95
      %s110 = sphi 0, %s96
      %s114 = sphi 0, %s114
      %s116 = sphi 0, %s114
      %s117 = sphi 0, %s116
      %s131 = sphi 0, %s117
      %s135 = sphi 0, %s135
      %s137 = sphi 0, %s135
      %s138 = sphi 0, %s137
      %s152 = sphi 0, %s138
      %s156 = sphi 0, %s156
      %s158 = sphi 0, %s156
      %s159 = sphi 0, %s158
      %s173 = sphi 0, %s159
      %s177 = sphi 0, %s177
      %s179 = sphi 0, %s177
      %s180 = sphi 0, %s179
      %s194 = sphi 0, %s180
      %s200 = sphi 0, %s202
      %s203 = sphi 0, %s200
      %s204 = sphi 0, %s203
      %s220 = sphi 0, %s204
    $region4: #{tpu_custom_call.1} parent=1 // loop_header_branch
      %20 = sbr.rel (%p18) target = $region8
    $region5: #{tpu_custom_call.1} parent=1 // loop_body
      %s22 = ssub.s32 %s17, 1
      %s23 = ssub.s32 %s17, 2
      %s24 = sadd.s32 %s17, 1
      %s25 = ssub.s32 %s17, %s24
      %p26 = scmp.eq.s32.totalorder %s25, 0
      %s28 = sadd.s32 %s27, 1
      %s29 = scalar_select %p26, %s27, %s28
      %p32 = pneg %p26
      %p33 = scmp.eq.s32.totalorder %s17, 1
      %p34 = por %p32, %p33
      %p35 = scmp.ne.s32.totalorder %s27, %s30
      %p36 = scmp.eq.s32.totalorder %s17, 0
      %p37 = por %p35, %p36
      %p38 = scmp.ne.s32.totalorder %s27, %s30
      %p39 = scmp.eq.s32.totalorder %s22, 1
      %p40 = por %p38, %p39
      %p41 = scmp.ne.s32.totalorder %s30, %s31
      %p42 = scmp.eq.s32.totalorder %s22, 0
      %p43 = por %p41, %p42
      %p44 = scmp.ne.s32.totalorder %s30, %s31
      %p45 = scmp.eq.s32.totalorder %s23, 1
      %p46 = por %p44, %p45
      %p48 = scmp.ne.s32.totalorder %s31, %s47
      %p49 = scmp.eq.s32.totalorder %s23, 0
      %p50 = por %p48, %p49
      %s52 = sadd.s32 %s51, 1
      %p55 = scmp.eq.s32.totalorder %s17, 1
      %p56 = scmp.ne.s32.totalorder %s51, %s53
      %p57 = scmp.eq.s32.totalorder %s17, 0
      %p58 = por %p56, %p57
      %p59 = scmp.ne.s32.totalorder %s51, %s53
      %p60 = scmp.eq.s32.totalorder %s22, 1
      %p61 = por %p59, %p60
      %p62 = scmp.ne.s32.totalorder %s53, %s54
      %p63 = scmp.eq.s32.totalorder %s22, 0
      %p64 = por %p62, %p63
      %p65 = scmp.ne.s32.totalorder %s53, %s54
      %p66 = scmp.eq.s32.totalorder %s23, 1
      %p67 = por %p65, %p66
      %p69 = scmp.ne.s32.totalorder %s54, %s68
      %p70 = scmp.eq.s32.totalorder %s23, 0
      %p71 = por %p69, %p70
      %s73 = sadd.s32 %s72, 1
      %p76 = scmp.eq.s32.totalorder %s17, 1
      %p77 = scmp.ne.s32.totalorder %s72, %s74
      %p78 = scmp.eq.s32.totalorder %s17, 0
      %p79 = por %p77, %p78
      %p80 = scmp.ne.s32.totalorder %s72, %s74
      %p81 = scmp.eq.s32.totalorder %s22, 1
      %p82 = por %p80, %p81
      %p83 = scmp.ne.s32.totalorder %s74, %s75
      %p84 = scmp.eq.s32.totalorder %s22, 0
      %p85 = por %p83, %p84
      %p86 = scmp.ne.s32.totalorder %s74, %s75
      %p87 = scmp.eq.s32.totalorder %s23, 1
      %p88 = por %p86, %p87
      %p90 = scmp.ne.s32.totalorder %s75, %s89
      %p91 = scmp.eq.s32.totalorder %s23, 0
      %p92 = por %p90, %p91
      %s94 = sadd.s32 %s93, 1
      %p97 = scmp.eq.s32.totalorder %s17, 1
      %p98 = scmp.ne.s32.totalorder %s93, %s95
      %p99 = scmp.eq.s32.totalorder %s17, 0
      %p100 = por %p98, %p99
      %p101 = scmp.ne.s32.totalorder %s93, %s95
      %p102 = scmp.eq.s32.totalorder %s22, 1
      %p103 = por %p101, %p102
      %p104 = scmp.ne.s32.totalorder %s95, %s96
      %p105 = scmp.eq.s32.totalorder %s22, 0
      %p106 = por %p104, %p105
      %p107 = scmp.ne.s32.totalorder %s95, %s96
      %p108 = scmp.eq.s32.totalorder %s23, 1
      %p109 = por %p107, %p108
      %p111 = scmp.ne.s32.totalorder %s96, %s110
      %p112 = scmp.eq.s32.totalorder %s23, 0
      %p113 = por %p111, %p112
      %s115 = sadd.s32 %s114, 1
      %p118 = scmp.eq.s32.totalorder %s17, 1
      %p119 = scmp.ne.s32.totalorder %s114, %s116
      %p120 = scmp.eq.s32.totalorder %s17, 0
      %p121 = por %p119, %p120
      %p122 = scmp.ne.s32.totalorder %s114, %s116
      %p123 = scmp.eq.s32.totalorder %s22, 1
      %p124 = por %p122, %p123
      %p125 = scmp.ne.s32.totalorder %s116, %s117
      %p126 = scmp.eq.s32.totalorder %s22, 0
      %p127 = por %p125, %p126
      %p128 = scmp.ne.s32.totalorder %s116, %s117
      %p129 = scmp.eq.s32.totalorder %s23, 1
      %p130 = por %p128, %p129
      %p132 = scmp.ne.s32.totalorder %s117, %s131
      %p133 = scmp.eq.s32.totalorder %s23, 0
      %p134 = por %p132, %p133
      %s136 = sadd.s32 %s135, 1
      %p139 = scmp.eq.s32.totalorder %s17, 1
      %p140 = scmp.ne.s32.totalorder %s135, %s137
      %p141 = scmp.eq.s32.totalorder %s17, 0
      %p142 = por %p140, %p141
      %p143 = scmp.ne.s32.totalorder %s135, %s137
      %p144 = scmp.eq.s32.totalorder %s22, 1
      %p145 = por %p143, %p144
      %p146 = scmp.ne.s32.totalorder %s137, %s138
      %p147 = scmp.eq.s32.totalorder %s22, 0
      %p148 = por %p146, %p147
      %p149 = scmp.ne.s32.totalorder %s137, %s138
      %p150 = scmp.eq.s32.totalorder %s23, 1
      %p151 = por %p149, %p150
      %p153 = scmp.ne.s32.totalorder %s138, %s152
      %p154 = scmp.eq.s32.totalorder %s23, 0
      %p155 = por %p153, %p154
      %s157 = sadd.s32 %s156, 1
      %p160 = scmp.eq.s32.totalorder %s17, 1
      %p161 = scmp.ne.s32.totalorder %s156, %s158
      %p162 = scmp.eq.s32.totalorder %s17, 0
      %p163 = por %p161, %p162
      %p164 = scmp.ne.s32.totalorder %s156, %s158
      %p165 = scmp.eq.s32.totalorder %s22, 1
      %p166 = por %p164, %p165
      %p167 = scmp.ne.s32.totalorder %s158, %s159
      %p168 = scmp.eq.s32.totalorder %s22, 0
      %p169 = por %p167, %p168
      %p170 = scmp.ne.s32.totalorder %s158, %s159
      %p171 = scmp.eq.s32.totalorder %s23, 1
      %p172 = por %p170, %p171
      %p174 = scmp.ne.s32.totalorder %s159, %s173
      %p175 = scmp.eq.s32.totalorder %s23, 0
      %p176 = por %p174, %p175
      %s178 = sadd.s32 %s177, 1
      %p181 = scmp.eq.s32.totalorder %s17, 1
      %p182 = scmp.ne.s32.totalorder %s177, %s179
      %p183 = scmp.eq.s32.totalorder %s17, 0
      %p184 = por %p182, %p183
      %p185 = scmp.ne.s32.totalorder %s177, %s179
      %p186 = scmp.eq.s32.totalorder %s22, 1
      %p187 = por %p185, %p186
      %p188 = scmp.ne.s32.totalorder %s179, %s180
      %p189 = scmp.eq.s32.totalorder %s22, 0
      %p190 = por %p188, %p189
      %p191 = scmp.ne.s32.totalorder %s179, %s180
      %p192 = scmp.eq.s32.totalorder %s23, 1
      %p193 = por %p191, %p192
      %p195 = scmp.ne.s32.totalorder %s180, %s194
      %p196 = scmp.eq.s32.totalorder %s23, 0
      %p197 = por %p195, %p196
      %s198 = ssub.s32 %s17, %s24
      %p199 = scmp.eq.s32.totalorder %s198, 0
      %s201 = sadd.s32 %s200, 1
      %s202 = scalar_select %p199, %s200, %s201
      %p205 = pneg %p199
      %p206 = scmp.eq.s32.totalorder %s17, 1
      %p207 = por %p205, %p206
      %p208 = scmp.ne.s32.totalorder %s200, %s203
      %p209 = scmp.eq.s32.totalorder %s17, 0
      %p210 = por %p208, %p209
      %p211 = scmp.ne.s32.totalorder %s200, %s203
      %p212 = scmp.eq.s32.totalorder %s22, 1
      %p213 = por %p211, %p212
      %p214 = scmp.ne.s32.totalorder %s203, %s204
      %p215 = scmp.eq.s32.totalorder %s22, 0
      %p216 = por %p214, %p215
      %p217 = scmp.ne.s32.totalorder %s203, %s204
      %p218 = scmp.eq.s32.totalorder %s23, 1
      %p219 = por %p217, %p218
      %p221 = scmp.ne.s32.totalorder %s204, %s220
      %p222 = scmp.eq.s32.totalorder %s23, 0
      %p223 = por %p221, %p222
      %p224 = scmp.le.s32.totalorder 1, %s17
      %p225 = scmp.lt.s32.totalorder %s17, 3
      %p226 = pnand %p224, %p225
      %p227 = pneg %p226
      // Predicated region
      $region9: #{tpu_custom_call.1} parent=5 // pred_check
        _
      $region10: #{tpu_custom_call.1} parent=5 // pred_check_branch
        %229 = sbr.rel (%p226) target = $region12
      $region11: #{tpu_custom_call.1} parent=5 // pred_region
        %s230 = ssub.s32 %s17, 1
        // Predicated region
        $region13: #{tpu_custom_call.1} parent=11 // pred_check
          %p231 = pneg %p64
        $region14: #{tpu_custom_call.1} parent=11 // pred_check_branch
          %233 = sbr.rel (%p231) target = $region16
        $region15: #{tpu_custom_call.1} parent=11 // pred_region
          _
        $region16: #{tpu_custom_call.1} parent=11 // pred_fallthru
          _
        // Predicated region
        $region17: #{tpu_custom_call.1} parent=11 // pred_check
          %p234 = pneg %p85
        $region18: #{tpu_custom_call.1} parent=11 // pred_check_branch
          %236 = sbr.rel (%p234) target = $region20
        $region19: #{tpu_custom_call.1} parent=11 // pred_region
          _
        $region20: #{tpu_custom_call.1} parent=11 // pred_fallthru
          _
        // Predicated region
        $region21: #{tpu_custom_call.1} parent=11 // pred_check
          %p237 = pneg %p106
        $region22: #{tpu_custom_call.1} parent=11 // pred_check_branch
          %239 = sbr.rel (%p237) target = $region24
        $region23: #{tpu_custom_call.1} parent=11 // pred_region
          _
        $region24: #{tpu_custom_call.1} parent=11 // pred_fallthru
          _
        // Predicated region
        $region25: #{tpu_custom_call.1} parent=11 // pred_check
          %p240 = pneg %p127
        $region26: #{tpu_custom_call.1} parent=11 // pred_check_branch
          %242 = sbr.rel (%p240) target = $region28
        $region27: #{tpu_custom_call.1} parent=11 // pred_region
          _
        $region28: #{tpu_custom_call.1} parent=11 // pred_fallthru
          _
        // Predicated region
        $region29: #{tpu_custom_call.1} parent=11 // pred_check
          %p243 = pneg %p148
        $region30: #{tpu_custom_call.1} parent=11 // pred_check_branch
          %245 = sbr.rel (%p243) target = $region32
        $region31: #{tpu_custom_call.1} parent=11 // pred_region
          _
        $region32: #{tpu_custom_call.1} parent=11 // pred_fallthru
          _
        // Predicated region
        $region33: #{tpu_custom_call.1} parent=11 // pred_check
          %p246 = pneg %p169
        $region34: #{tpu_custom_call.1} parent=11 // pred_check_branch
          %248 = sbr.rel (%p246) target = $region36
        $region35: #{tpu_custom_call.1} parent=11 // pred_region
          _
        $region36: #{tpu_custom_call.1} parent=11 // pred_fallthru
          _
        // Predicated region
        $region37: #{tpu_custom_call.1} parent=11 // pred_check
          %p249 = pneg %p190
        $region38: #{tpu_custom_call.1} parent=11 // pred_check_branch
          %251 = sbr.rel (%p249) target = $region40
        $region39: #{tpu_custom_call.1} parent=11 // pred_region
          _
        $region40: #{tpu_custom_call.1} parent=11 // pred_fallthru
          _
      $region12: #{tpu_custom_call.1} parent=5 // pred_fallthru
        _
      %p252 = scmp.lt.s32.totalorder %s17, 2
      // Predicated region
      $region41: #{tpu_custom_call.1} parent=5 // pred_check
        %p253 = pneg %p252
      $region42: #{tpu_custom_call.1} parent=5 // pred_check_branch
        %255 = sbr.rel (%p253) target = $region44
      $region43: #{tpu_custom_call.1} parent=5 // pred_region
        // Predicated region
        $region45: #{tpu_custom_call.1} parent=43 // pred_check
          %p256 = pneg %p37
        $region46: #{tpu_custom_call.1} parent=43 // pred_check_branch
          %258 = sbr.rel (%p256) target = $region48
        $region47: #{tpu_custom_call.1} parent=43 // pred_region
          %p259 = scmp.lt.s32.totalorder %s17, 1
          %s260 = scalar_select %p259, %s17, 1
          %s261 = scalar_lea.vmem %s0, %s260
        $region48: #{tpu_custom_call.1} parent=43 // pred_fallthru
          _
      $region44: #{tpu_custom_call.1} parent=5 // pred_fallthru
        _
      %p262 = scmp.le.s32.totalorder 1, %s17
      %p263 = scmp.lt.s32.totalorder %s17, 3
      %p264 = pnand %p262, %p263
      %p265 = pneg %p264
      // Predicated region
      $region49: #{tpu_custom_call.1} parent=5 // pred_check
        _
      $region50: #{tpu_custom_call.1} parent=5 // pred_check_branch
        %267 = sbr.rel (%p264) target = $region52
      $region51: #{tpu_custom_call.1} parent=5 // pred_region
        %s268 = ssub.s32 %s17, 1
        %p269 = scmp.lt.s32.totalorder %s22, 1
        %s270 = scalar_select %p269, %s22, 1
        %s271 = scalar_lea.vmem %s0, %s270
        %p272 = pneg %p43
        %p273 = pneg %p40
        %p274 = pneg %p64
        %p275 = pneg %p61
        %p276 = pneg %p85
        %p277 = pneg %p82
        %p278 = pneg %p106
        %p279 = pneg %p103
        %p280 = pneg %p127
        %p281 = pneg %p124
        %p282 = pneg %p148
        %p283 = pneg %p145
        %p284 = pneg %p169
        %p285 = pneg %p166
        %p286 = pneg %p190
        %p287 = pneg %p187
        %p288 = pneg %p216
        %p289 = pneg %p213
        %s290 = sand.u32 %s203, 1
        %s291 = scalar_lea.sflag [#allocation3], %s290
        %s292 = sand.u32 %s203, 1
        %s293 = smul.addr %s292, 16
        %s294 = scalar_lea.vmem [#allocation2], %s293
        %p295 = scmp.lt.s32.totalorder %s22, 1
        %s296 = scalar_select %p295, %s22, 1
        %s297 = scalar_lea.vmem %s0, %s296
        %s298 = smul.u32 2, %s22
        %v299 = vld [vmem:[%s297] sm:$0x1]
        %v300 = vld [vmem:[%s1] sm:$0xff]
        %v301 = vld [vmem:[%s1 + $0x8] sm:$0xff]
        %v302 = vld [vmem:[%s1 + $0x10] sm:$0xff]
        %v303 = vld [vmem:[%s1 + $0x18] sm:$0xff]
        %v304 = vld [vmem:[%s1 + $0x20] sm:$0xff]
        %v305 = vld [vmem:[%s1 + $0x28] sm:$0xff]
        %v306 = vld [vmem:[%s1 + $0x30] sm:$0xff]
        %v307 = vld [vmem:[%s1 + $0x38] sm:$0xff]
        %v308 = vld [vmem:[%s1 + $0x40] sm:$0xff]
        %v309 = vld [vmem:[%s1 + $0x48] sm:$0xff]
        %v310 = vld [vmem:[%s1 + $0x50] sm:$0xff]
        %v311 = vld [vmem:[%s1 + $0x58] sm:$0xff]
        %v312 = vld [vmem:[%s1 + $0x60] sm:$0xff]
        %v313 = vld [vmem:[%s1 + $0x68] sm:$0xff]
        %v314 = vld [vmem:[%s1 + $0x70] sm:$0xff]
        %v315 = vld [vmem:[%s1 + $0x78] sm:$0xff]
        %vm316 = vcmask 261120
        %v318 = vsel %vm316, %v299, 0
        %320 = vmatpush.msra.mxu0 0.0
        %321 = vmatpush.msra.mxu0 0.0
        %322 = vmatpush.msra.mxu0 0.0
        %323 = vmatpush.msra.mxu0 0.0
        %324 = vmatpush.msra.mxu0 0.0
        %325 = vmatpush.msra.mxu0 0.0
        %326 = vmatpush.msra.mxu0 0.0
        %327 = vmatpush.msra.mxu0 0.0
        %328 = vmatpush.msra.mxu0 0.0
        %329 = vmatpush.msra.mxu0 0.0
        %330 = vmatpush.msra.mxu0 0.0
        %331 = vmatpush.msra.mxu0 0.0
        %332 = vmatpush.msra.mxu0 %v312
        %333 = vmatpush.msra.mxu0 %v308
        %334 = vmatpush.msra.mxu0 %v304
        %335 = vmatpush.msra.mxu0 %v300
        %336 = vmatmul.f32.gmra.mxu0 %v318
        %v337 = vpop.f32.mrf.mxu0
        %v338 = vadd.f32 0.0, %v337
        %339 = vdwg.mxu0
        %340 = vmatpush.msra.mxu0 0.0
        %341 = vmatpush.msra.mxu0 0.0
        %342 = vmatpush.msra.mxu0 0.0
        %343 = vmatpush.msra.mxu0 0.0
        %344 = vmatpush.msra.mxu0 0.0
        %345 = vmatpush.msra.mxu0 0.0
        %346 = vmatpush.msra.mxu0 0.0
        %347 = vmatpush.msra.mxu0 0.0
        %348 = vmatpush.msra.mxu0 0.0
        %349 = vmatpush.msra.mxu0 0.0
        %350 = vmatpush.msra.mxu0 0.0
        %351 = vmatpush.msra.mxu0 0.0
        %352 = vmatpush.msra.mxu0 %v313
        %353 = vmatpush.msra.mxu0 %v309
        %354 = vmatpush.msra.mxu0 %v305
        %355 = vmatpush.msra.mxu0 %v301
        %356 = vmatmul.f32.gmra.mxu0 %v318
        %v357 = vpop.f32.mrf.mxu0
        %v358 = vadd.f32 0.0, %v357
        %359 = vdwg.mxu0
        %360 = vmatpush.msra.mxu0 0.0
        %361 = vmatpush.msra.mxu0 0.0
        %362 = vmatpush.msra.mxu0 0.0
        %363 = vmatpush.msra.mxu0 0.0
        %364 = vmatpush.msra.mxu0 0.0
        %365 = vmatpush.msra.mxu0 0.0
        %366 = vmatpush.msra.mxu0 0.0
        %367 = vmatpush.msra.mxu0 0.0
        %368 = vmatpush.msra.mxu0 0.0
        %369 = vmatpush.msra.mxu0 0.0
        %370 = vmatpush.msra.mxu0 0.0
        %371 = vmatpush.msra.mxu0 0.0
        %372 = vmatpush.msra.mxu0 %v314
        %373 = vmatpush.msra.mxu0 %v310
        %374 = vmatpush.msra.mxu0 %v306
        %375 = vmatpush.msra.mxu0 %v302
        %376 = vmatmul.f32.gmra.mxu0 %v318
        %v377 = vpop.f32.mrf.mxu0
        %v378 = vadd.f32 0.0, %v377
        %379 = vdwg.mxu0
        %380 = vmatpush.msra.mxu0 0.0
        %381 = vmatpush.msra.mxu0 0.0
        %382 = vmatpush.msra.mxu0 0.0
        %383 = vmatpush.msra.mxu0 0.0
        %384 = vmatpush.msra.mxu0 0.0
        %385 = vmatpush.msra.mxu0 0.0
        %386 = vmatpush.msra.mxu0 0.0
        %387 = vmatpush.msra.mxu0 0.0
        %388 = vmatpush.msra.mxu0 0.0
        %389 = vmatpush.msra.mxu0 0.0
        %390 = vmatpush.msra.mxu0 0.0
        %391 = vmatpush.msra.mxu0 0.0
        %392 = vmatpush.msra.mxu0 %v315
        %393 = vmatpush.msra.mxu0 %v311
        %394 = vmatpush.msra.mxu0 %v307
        %395 = vmatpush.msra.mxu0 %v303
        %396 = vmatmul.f32.gmra.mxu0 %v318
        %v397 = vpop.f32.mrf.mxu0
        %v398 = vadd.f32 0.0, %v397
        %399 = vdwg.mxu0
        %v401 = vrot.slane %v338, 7
        %402 = vrot.lane.b32.xlu0 %v401, 96
        %v403 = vpop.permute.xlu0 %402
        %v405 = vrot.slane %v338, 6
        %406 = vrot.lane.b32.xlu0 %v405, 64
        %v407 = vpop.permute.xlu0 %406
        %v409 = vrot.slane %v338, 5
        %410 = vrot.lane.b32.xlu0 %v409, 32
        %v411 = vpop.permute.xlu0 %410
        %v414 = vrot.slane %v358, 4
        %v416 = vrot.slane %v358, 3
        %417 = vrot.lane.b32.xlu0 %v416, 96
        %v418 = vpop.permute.xlu0 %417
        %v420 = vrot.slane %v358, 2
        %421 = vrot.lane.b32.xlu0 %v420, 64
        %v422 = vpop.permute.xlu0 %421
        %v424 = vrot.slane %v358, 1
        %425 = vrot.lane.b32.xlu0 %v424, 32
        %v426 = vpop.permute.xlu0 %425
        %v429 = vrot.slane %v378, 7
        %430 = vrot.lane.b32.xlu0 %v429, 96
        %v431 = vpop.permute.xlu0 %430
        %v433 = vrot.slane %v378, 6
        %434 = vrot.lane.b32.xlu0 %v433, 64
        %v435 = vpop.permute.xlu0 %434
        %v437 = vrot.slane %v378, 5
        %438 = vrot.lane.b32.xlu0 %v437, 32
        %v439 = vpop.permute.xlu0 %438
        %v442 = vrot.slane %v398, 4
        %v444 = vrot.slane %v398, 3
        %445 = vrot.lane.b32.xlu0 %v444, 96
        %v446 = vpop.permute.xlu0 %445
        %v448 = vrot.slane %v398, 2
        %449 = vrot.lane.b32.xlu0 %v448, 64
        %v450 = vpop.permute.xlu0 %449
        %v452 = vrot.slane %v398, 1
        %453 = vrot.lane.b32.xlu0 %v452, 32
        %v454 = vpop.permute.xlu0 %453
        %vm456 = vcmask 1040384
        %v457 = vsel %vm456, %v338, %v403
        %vm458 = vcmask 1041408
        %v459 = vsel %vm458, %v457, %v407
        %vm460 = vcmask 1042432
        %v461 = vsel %vm460, %v459, %v411
        %vm462 = vcmask 1043456
        %v463 = vsel %vm462, %v461, %v414
        %vm464 = vcmask 1044480
        %v465 = vsel %vm464, %v463, %v418
        %vm466 = vcmask 1045504
        %v467 = vsel %vm466, %v465, %v422
        %vm468 = vcmask 1046528
        %v469 = vsel %vm468, %v467, %v426
        %v470 = vsel %vm456, %v378, %v431
        %v471 = vsel %vm458, %v470, %v435
        %v472 = vsel %vm460, %v471, %v439
        %v473 = vsel %vm462, %v472, %v442
        %v474 = vsel %vm464, %v473, %v446
        %v475 = vsel %vm466, %v474, %v450
        %v476 = vsel %vm468, %v475, %v454
        %v477 = vld [vmem:[%s2] sm:$0x1]
        %v479 = vperm.slane %v477, 0
        %v481 = vadd.f32 %v469, %v479
        %v482 = vadd.f32 %v476, %v479
        %v483 = vmul.f32 %v481, %v481
        %v484 = vmul.f32 %v482, %v482
        %v485 = vsel %vm316, %v483, 0.0
        %486 = vadd.xlane.f32.xlu0 %v485
        %v487 = vpop.xlane.xlu0 %486
        %v488 = vsel %vm316, %v484, 0.0
        %489 = vadd.xlane.f32.xlu0 %v488
        %v490 = vpop.xlane.xlu0 %489
        %v491 = vrcp.pop 32.0
        %v492 = vmul.f32 32.0, %v491
        %v493 = vsub.f32 1.0, %v492
        %v494 = vmul.f32 %v491, %v493
        %v495 = vadd.f32 %v491, %v494
        %vm496 = vweird.f32 %v491
        %v497 = vsel %vm496, %v491, %v495
        %v498 = vmul.f32 %v487, %v497
        %v499 = vmul.f32 %v490, %v497
        %v500 = vadd.f32 %v498, 1e-08
        %v501 = vadd.f32 %v499, 1e-08
        %v502 = vrsqrt.pop %v500
        %v503 = vmul.f32 %v502, %v500
        %v504 = vmul.f32 %v503, %v502
        %v505 = vmul.f32 0.5, %v504
        %v506 = vsub.f32 1.5, %v505
        %v507 = vmul.f32 %v502, %v506
        %vm508 = vweird.f32 %v500
        %vm509 = vweird.f32 %v502
        %vm510 = vmor %vm508, %vm509
        %v511 = vsel %vm510, %v502, %v507
        %v512 = vrsqrt.pop %v501
        %v513 = vmul.f32 %v512, %v501
        %v514 = vmul.f32 %v513, %v512
        %v515 = vmul.f32 0.5, %v514
        %v516 = vsub.f32 1.5, %v515
        %v517 = vmul.f32 %v512, %v516
        %vm518 = vweird.f32 %v501
        %vm519 = vweird.f32 %v512
        %vm520 = vmor %vm518, %vm519
        %v521 = vsel %vm520, %v512, %v517
        %v522 = vmul.f32 %v481, %v511
        %v523 = vmul.f32 %v482, %v521
        %vm524 = vcmp.ge.f32.partialorder %v522, 0.0
        %vm525 = vcmp.ge.f32.partialorder %v523, 0.0
        %v526 = vmul.f32 %v522, 0.2
        %v527 = vmul.f32 %v523, 0.2
        %v528 = vsel %vm524, %v522, %v526
        %v529 = vsel %vm525, %v523, %v527
        %v531 = vrot.slane %v529, 3
        %v534 = vrot.slane %v528, 3
        %v535 = vsel %vm464, %v534, %v531
        %v538 = vsel %vm464, %v531, %v534
        %v539 = vld [vmem:[%s3] sm:$0xff]
        %v540 = vld [vmem:[%s3 + $0x8] sm:$0xff]
        %542 = vset.pattern.permute.xlu0 0
        %543 = vperm.xlu0 %542, %v539
        %v544 = vpop.permute.xlu0 %543
        %547 = vset.pattern.permute.xlu0 0
        %548 = vperm.xlu0 %547, %v540
        %v549 = vpop.permute.xlu0 %548
        %v551 = vmul.f32 %v538, %v544
        %v552 = vmul.f32 %v535, %v549
        %v553 = vrot.slane %v529, 4
        %v555 = vrot.slane %v528, 4
        %v556 = vsel %vm462, %v555, %v553
        %v559 = vsel %vm462, %v553, %v555
        %s560 = scalar_lea.vmem %s3, 16
        %v561 = vld [vmem:[%s560] sm:$0xff]
        %v562 = vld [vmem:[%s560 + $0x8] sm:$0xff]
        %564 = vset.pattern.permute.xlu0 0
        %565 = vperm.xlu0 %564, %v561
        %v566 = vpop.permute.xlu0 %565
        %569 = vset.pattern.permute.xlu0 0
        %570 = vperm.xlu0 %569, %v562
        %v571 = vpop.permute.xlu0 %570
        %v573 = vmul.f32 %v559, %v566
        %v574 = vmul.f32 %v556, %v571
        %v575 = vrot.slane %v529, 5
        %v577 = vrot.slane %v528, 5
        %v578 = vsel %vm460, %v577, %v575
        %v581 = vsel %vm460, %v575, %v577
        %s582 = scalar_lea.vmem %s3, 32
        %v583 = vld [vmem:[%s582] sm:$0xff]
        %v584 = vld [vmem:[%s582 + $0x8] sm:$0xff]
        %586 = vset.pattern.permute.xlu0 0
        %587 = vperm.xlu0 %586, %v583
        %v588 = vpop.permute.xlu0 %587
        %591 = vset.pattern.permute.xlu0 0
        %592 = vperm.xlu0 %591, %v584
        %v593 = vpop.permute.xlu0 %592
        %v595 = vmul.f32 %v581, %v588
        %v596 = vmul.f32 %v578, %v593
        %v597 = vrot.slane %v529, 7
        %v599 = vrot.slane %v528, 7
        %v600 = vsel %vm456, %v599, %v597
        %v603 = vsel %vm456, %v597, %v599
        %s604 = scalar_lea.vmem %s3, 48
        %v605 = vld [vmem:[%s604] sm:$0xff]
        %v606 = vld [vmem:[%s604 + $0x8] sm:$0xff]
        %608 = vset.pattern.permute.xlu0 0
        %609 = vperm.xlu0 %608, %v605
        %v610 = vpop.permute.xlu0 %609
        %613 = vset.pattern.permute.xlu0 0
        %614 = vperm.xlu0 %613, %v606
        %v615 = vpop.permute.xlu0 %614
        %v617 = vmul.f32 %v603, %v610
        %v618 = vmul.f32 %v600, %v615
        %s619 = scalar_lea.vmem %s3, 64
        %v620 = vld [vmem:[%s619] sm:$0xff]
        %v621 = vld [vmem:[%s619 + $0x8] sm:$0xff]
        %623 = vset.pattern.permute.xlu0 0
        %624 = vperm.xlu0 %623, %v620
        %v625 = vpop.permute.xlu0 %624
        %628 = vset.pattern.permute.xlu0 0
        %629 = vperm.xlu0 %628, %v621
        %v630 = vpop.permute.xlu0 %629
        %v632 = vmul.f32 %v528, %v625
        %v633 = vmul.f32 %v529, %v630
        %v634 = vrot.slane %v528, 1
        %v635 = vrot.slane %v529, 1
        %v636 = vsel %vm468, %v634, %v635
        %v640 = vsel %vm468, %v635, %v634
        %s641 = scalar_lea.vmem %s3, 80
        %v642 = vld [vmem:[%s641] sm:$0xff]
        %v643 = vld [vmem:[%s641 + $0x8] sm:$0xff]
        %645 = vset.pattern.permute.xlu0 0
        %646 = vperm.xlu0 %645, %v642
        %v647 = vpop.permute.xlu0 %646
        %650 = vset.pattern.permute.xlu0 0
        %651 = vperm.xlu0 %650, %v643
        %v652 = vpop.permute.xlu0 %651
        %v654 = vmul.f32 %v636, %v647
        %v655 = vmul.f32 %v640, %v652
        %s656 = scalar_lea.vmem %s3, 96
        %v657 = vld [vmem:[%s656] sm:$0xff]
        %v658 = vld [vmem:[%s656 + $0x8] sm:$0xff]
        %660 = vset.pattern.permute.xlu0 0
        %661 = vperm.xlu0 %660, %v657
        %v662 = vpop.permute.xlu0 %661
        %665 = vset.pattern.permute.xlu0 0
        %666 = vperm.xlu0 %665, %v658
        %v667 = vpop.permute.xlu0 %666
        %v669 = vmul.f32 %v535, %v662
        %v670 = vmul.f32 %v538, %v667
        %s671 = scalar_lea.vmem %s3, 112
        %v672 = vld [vmem:[%s671] sm:$0xff]
        %v673 = vld [vmem:[%s671 + $0x8] sm:$0xff]
        %675 = vset.pattern.permute.xlu0 0
        %676 = vperm.xlu0 %675, %v672
        %v677 = vpop.permute.xlu0 %676
        %680 = vset.pattern.permute.xlu0 0
        %681 = vperm.xlu0 %680, %v673
        %v682 = vpop.permute.xlu0 %681
        %v684 = vmul.f32 %v556, %v677
        %v685 = vmul.f32 %v559, %v682
        %s686 = scalar_lea.vmem %s3, 128
        %v687 = vld [vmem:[%s686] sm:$0xff]
        %v688 = vld [vmem:[%s686 + $0x8] sm:$0xff]
        %690 = vset.pattern.permute.xlu0 0
        %691 = vperm.xlu0 %690, %v687
        %v692 = vpop.permute.xlu0 %691
        %695 = vset.pattern.permute.xlu0 0
        %696 = vperm.xlu0 %695, %v688
        %v697 = vpop.permute.xlu0 %696
        %v699 = vmul.f32 %v578, %v692
        %v700 = vmul.f32 %v581, %v697
        %703 = vrot.lane.b32.xlu0 %v573, 32
        %v704 = vpop.permute.xlu0 %703
        %705 = vrot.lane.b32.xlu0 %v574, 32
        %v706 = vpop.permute.xlu0 %705
        %711 = vrot.lane.b32.xlu0 %v595, 64
        %v712 = vpop.permute.xlu0 %711
        %713 = vrot.lane.b32.xlu0 %v596, 64
        %v714 = vpop.permute.xlu0 %713
        %719 = vrot.lane.b32.xlu0 %v617, 96
        %v720 = vpop.permute.xlu0 %719
        %721 = vrot.lane.b32.xlu0 %v618, 96
        %v722 = vpop.permute.xlu0 %721
        %727 = vrot.lane.b32.xlu0 %v654, 32
        %v728 = vpop.permute.xlu0 %727
        %729 = vrot.lane.b32.xlu0 %v655, 32
        %v730 = vpop.permute.xlu0 %729
        %735 = vrot.lane.b32.xlu0 %v669, 64
        %v736 = vpop.permute.xlu0 %735
        %737 = vrot.lane.b32.xlu0 %v670, 64
        %v738 = vpop.permute.xlu0 %737
        %743 = vrot.lane.b32.xlu0 %v684, 96
        %v744 = vpop.permute.xlu0 %743
        %745 = vrot.lane.b32.xlu0 %v685, 96
        %v746 = vpop.permute.xlu0 %745
        %v749 = vsel %vm316, %v551, %v704
        %v750 = vsel %vm316, %v552, %v706
        %vm751 = vcmask 523264
        %v752 = vsel %vm751, %v749, %v712
        %v753 = vsel %vm751, %v750, %v714
        %vm754 = vcmask 785408
        %v755 = vsel %vm754, %v752, %v720
        %v756 = vsel %vm754, %v753, %v722
        %v757 = vsel %vm316, %v632, %v728
        %v758 = vsel %vm316, %v633, %v730
        %v759 = vsel %vm751, %v757, %v736
        %v760 = vsel %vm751, %v758, %v738
        %v761 = vsel %vm754, %v759, %v744
        %v762 = vsel %vm754, %v760, %v746
        %v763 = vld [vmem:[%s4] sm:$0xff]
        %v764 = vld [vmem:[%s4 + $0x8] sm:$0xff]
        %v765 = vld [vmem:[%s4 + $0x10] sm:$0xff]
        %v766 = vld [vmem:[%s4 + $0x18] sm:$0xff]
        %v767 = vld [vmem:[%s4 + $0x20] sm:$0xff]
        %v768 = vld [vmem:[%s4 + $0x28] sm:$0xff]
        %v769 = vld [vmem:[%s4 + $0x30] sm:$0xff]
        %v770 = vld [vmem:[%s4 + $0x38] sm:$0xff]
        %v771 = vld [vmem:[%s4 + $0x40] sm:$0xff]
        %v772 = vld [vmem:[%s4 + $0x48] sm:$0xff]
        %v773 = vld [vmem:[%s4 + $0x50] sm:$0xff]
        %v774 = vld [vmem:[%s4 + $0x58] sm:$0xff]
        %v775 = vld [vmem:[%s4 + $0x60] sm:$0xff]
        %v776 = vld [vmem:[%s4 + $0x68] sm:$0xff]
        %v777 = vld [vmem:[%s4 + $0x70] sm:$0xff]
        %v778 = vld [vmem:[%s4 + $0x78] sm:$0xff]
        %v779 = vld [vmem:[%s4 + $0x80] sm:$0xff]
        %v780 = vld [vmem:[%s4 + $0x88] sm:$0xff]
        %v781 = vld [vmem:[%s4 + $0x90] sm:$0xff]
        %v782 = vld [vmem:[%s4 + $0x98] sm:$0xff]
        %v783 = vld [vmem:[%s4 + $0xa0] sm:$0xff]
        %v784 = vld [vmem:[%s4 + $0xa8] sm:$0xff]
        %v785 = vld [vmem:[%s4 + $0xb0] sm:$0xff]
        %v786 = vld [vmem:[%s4 + $0xb8] sm:$0xff]
        %v787 = vld [vmem:[%s4 + $0xc0] sm:$0xff]
        %v788 = vld [vmem:[%s4 + $0xc8] sm:$0xff]
        %v789 = vld [vmem:[%s4 + $0xd0] sm:$0xff]
        %v790 = vld [vmem:[%s4 + $0xd8] sm:$0xff]
        %v791 = vld [vmem:[%s4 + $0xe0] sm:$0xff]
        %v792 = vld [vmem:[%s4 + $0xe8] sm:$0xff]
        %v793 = vld [vmem:[%s4 + $0xf0] sm:$0xff]
        %v794 = vld [vmem:[%s4 + $0xf8] sm:$0xff]
        %v795 = vld [vmem:[%s4 + $0x100] sm:$0xff]
        %v796 = vld [vmem:[%s4 + $0x108] sm:$0xff]
        %v797 = vld [vmem:[%s4 + $0x110] sm:$0xff]
        %v798 = vld [vmem:[%s4 + $0x118] sm:$0xff]
        %v799 = vld [vmem:[%s5] sm:$0x1]
        %v801 = vperm.slane %v799, 0
        %v804 = vsel %vm316, %v699, 0
        %v807 = vsel %vm316, %v700, 0
        %809 = vmatpush.msra.mxu0 %v778
        %810 = vmatpush.msra.mxu0 %v777
        %811 = vmatpush.msra.mxu0 %v776
        %812 = vmatpush.msra.mxu0 %v775
        %813 = vmatpush.msra.mxu0 %v774
        %814 = vmatpush.msra.mxu0 %v773
        %815 = vmatpush.msra.mxu0 %v772
        %816 = vmatpush.msra.mxu0 %v771
        %817 = vmatpush.msra.mxu0 %v770
        %818 = vmatpush.msra.mxu0 %v769
        %819 = vmatpush.msra.mxu0 %v768
        %820 = vmatpush.msra.mxu0 %v767
        %821 = vmatpush.msra.mxu0 %v766
        %822 = vmatpush.msra.mxu0 %v765
        %823 = vmatpush.msra.mxu0 %v764
        %824 = vmatpush.msra.mxu0 %v763
        %825 = vmatmul.f32.gmra.mxu0 %v755
        %v826 = vpop.f32.mrf.mxu0
        %v827 = vadd.f32 %v801, %v826
        %828 = vmatmul.f32.gmra.mxu0 %v756
        %v829 = vpop.f32.mrf.mxu0
        %v830 = vadd.f32 %v801, %v829
        %831 = vdwg.mxu0
        %832 = vmatpush.msra.mxu0 %v794
        %833 = vmatpush.msra.mxu0 %v793
        %834 = vmatpush.msra.mxu0 %v792
        %835 = vmatpush.msra.mxu0 %v791
        %836 = vmatpush.msra.mxu0 %v790
        %837 = vmatpush.msra.mxu0 %v789
        %838 = vmatpush.msra.mxu0 %v788
        %839 = vmatpush.msra.mxu0 %v787
        %840 = vmatpush.msra.mxu0 %v786
        %841 = vmatpush.msra.mxu0 %v785
        %842 = vmatpush.msra.mxu0 %v784
        %843 = vmatpush.msra.mxu0 %v783
        %844 = vmatpush.msra.mxu0 %v782
        %845 = vmatpush.msra.mxu0 %v781
        %846 = vmatpush.msra.mxu0 %v780
        %847 = vmatpush.msra.mxu0 %v779
        %848 = vmatmul.f32.gmra.mxu0 %v761
        %v849 = vpop.f32.mrf.mxu0
        %v850 = vadd.f32 %v827, %v849
        %851 = vmatmul.f32.gmra.mxu0 %v762
        %v852 = vpop.f32.mrf.mxu0
        %v853 = vadd.f32 %v830, %v852
        %854 = vdwg.mxu0
        %855 = vmatpush.msra.mxu0 0.0
        %856 = vmatpush.msra.mxu0 0.0
        %857 = vmatpush.msra.mxu0 0.0
        %858 = vmatpush.msra.mxu0 0.0
        %859 = vmatpush.msra.mxu0 0.0
        %860 = vmatpush.msra.mxu0 0.0
        %861 = vmatpush.msra.mxu0 0.0
        %862 = vmatpush.msra.mxu0 0.0
        %863 = vmatpush.msra.mxu0 0.0
        %864 = vmatpush.msra.mxu0 0.0
        %865 = vmatpush.msra.mxu0 0.0
        %866 = vmatpush.msra.mxu0 0.0
        %867 = vmatpush.msra.mxu0 %v798
        %868 = vmatpush.msra.mxu0 %v797
        %869 = vmatpush.msra.mxu0 %v796
        %870 = vmatpush.msra.mxu0 %v795
        %871 = vmatmul.f32.gmra.mxu0 %v804
        %v872 = vpop.f32.mrf.mxu0
        %v873 = vadd.f32 %v850, %v872
        %874 = vmatmul.f32.gmra.mxu0 %v807
        %v875 = vpop.f32.mrf.mxu0
        %v876 = vadd.f32 %v853, %v875
        %877 = vdwg.mxu0
        %v878 = vmul.f32 %v873, %v873
        %v879 = vmul.f32 %v876, %v876
        %v880 = vsel %vm316, %v878, 0.0
        %881 = vadd.xlane.f32.xlu0 %v880
        %v882 = vpop.xlane.xlu0 %881
        %v883 = vsel %vm316, %v879, 0.0
        %884 = vadd.xlane.f32.xlu0 %v883
        %v885 = vpop.xlane.xlu0 %884
        %v886 = vmul.f32 %v882, %v497
        %v887 = vmul.f32 %v885, %v497
        %v888 = vadd.f32 %v886, 1e-08
        %v889 = vadd.f32 %v887, 1e-08
        %v890 = vrsqrt.pop %v888
        %v891 = vmul.f32 %v890, %v888
        %v892 = vmul.f32 %v891, %v890
        %v893 = vmul.f32 0.5, %v892
        %v894 = vsub.f32 1.5, %v893
        %v895 = vmul.f32 %v890, %v894
        %vm896 = vweird.f32 %v888
        %vm897 = vweird.f32 %v890
        %vm898 = vmor %vm896, %vm897
        %v899 = vsel %vm898, %v890, %v895
        %v900 = vrsqrt.pop %v889
        %v901 = vmul.f32 %v900, %v889
        %v902 = vmul.f32 %v901, %v900
        %v903 = vmul.f32 0.5, %v902
        %v904 = vsub.f32 1.5, %v903
        %v905 = vmul.f32 %v900, %v904
        %vm906 = vweird.f32 %v889
        %vm907 = vweird.f32 %v900
        %vm908 = vmor %vm906, %vm907
        %v909 = vsel %vm908, %v900, %v905
        %v910 = vmul.f32 %v873, %v899
        %v911 = vmul.f32 %v876, %v909
        %vm912 = vcmp.ge.f32.partialorder %v910, 0.0
        %vm913 = vcmp.ge.f32.partialorder %v911, 0.0
        %v914 = vmul.f32 %v910, 0.2
        %v915 = vmul.f32 %v911, 0.2
        %v916 = vsel %vm912, %v910, %v914
        %v917 = vsel %vm913, %v911, %v915
        %v918 = vld [vmem:[%s6] sm:$0xff]
        %v919 = vld [vmem:[%s6 + $0x8] sm:$0xff]
        %v920 = vld [vmem:[%s6 + $0x10] sm:$0xff]
        %v921 = vld [vmem:[%s6 + $0x18] sm:$0xff]
        %v922 = vld [vmem:[%s7] sm:$0x1]
        %v924 = vperm.slane %v922, 0
        %v927 = vsel %vm316, %v916, 0
        %v930 = vsel %vm316, %v917, 0
        %932 = vmatpush.msra.mxu0 0.0
        %933 = vmatpush.msra.mxu0 0.0
        %934 = vmatpush.msra.mxu0 0.0
        %935 = vmatpush.msra.mxu0 0.0
        %936 = vmatpush.msra.mxu0 0.0
        %937 = vmatpush.msra.mxu0 0.0
        %938 = vmatpush.msra.mxu0 0.0
        %939 = vmatpush.msra.mxu0 0.0
        %940 = vmatpush.msra.mxu0 0.0
        %941 = vmatpush.msra.mxu0 0.0
        %942 = vmatpush.msra.mxu0 0.0
        %943 = vmatpush.msra.mxu0 0.0
        %944 = vmatpush.msra.mxu0 %v921
        %945 = vmatpush.msra.mxu0 %v920
        %946 = vmatpush.msra.mxu0 %v919
        %947 = vmatpush.msra.mxu0 %v918
        %948 = vmatmul.f32.gmra.mxu0 %v927
        %v949 = vpop.f32.mrf.mxu0
        %v950 = vadd.f32 %v924, %v949
        %951 = vmatmul.f32.gmra.mxu0 %v930
        %v952 = vpop.f32.mrf.mxu0
        %v953 = vadd.f32 %v924, %v952
        %954 = vdwg.mxu0
        %v955 = vtanh.pop %v950
        %v956 = vtanh.pop %v953
        %957 = vst [vmem:[%s294] sm:$0xff] %v955
        %958 = vst [vmem:[%s294 + $0x8] sm:$0xff] %v956
        %s959 = sand.u32 %s203, 1
        %s960 = scalar_lea.sflag [#allocation3], %s959
        %s961 = sand.u32 %s203, 1
        %s962 = smul.addr %s961, 16
        %s963 = scalar_lea.vmem [#allocation2], %s962
        // Predicated region
        $region53: #{tpu_custom_call.1} parent=51 // pred_check
          %p964 = pneg %p213
        $region54: #{tpu_custom_call.1} parent=51 // pred_check_branch
          %966 = sbr.rel (%p964) target = $region56
        $region55: #{tpu_custom_call.1} parent=51 // pred_region
          %s967 = smul.u32 2, %s22
          %969 = vsyncadd %s960, 0
          %s970 = smul.addr %s967, 8
          %s971 = scalar_lea.hbm %s8, %s970
          %s972 = sshll.u32 %s963, 4
          %s973 = int_to_ptr.vmem [resolvable:$true] %s972
          %s974 = sshll.u32 %s971, 4
          %s975 = int_to_ptr.hbm [resolvable:$true] %s974
          %980 = dma.vmem_to_hbm [thread:$0]  %s973, 256, %s975, %s960, 128, 128, 8
        $region56: #{tpu_custom_call.1} parent=51 // pred_fallthru
          _
      $region52: #{tpu_custom_call.1} parent=5 // pred_fallthru
        _
      %p981 = scmp.le.s32.totalorder 2, %s17
      // Predicated region
      $region57: #{tpu_custom_call.1} parent=5 // pred_check
        %p982 = pneg %p981
      $region58: #{tpu_custom_call.1} parent=5 // pred_check_branch
        %984 = sbr.rel (%p982) target = $region60
      $region59: #{tpu_custom_call.1} parent=5 // pred_region
        %s985 = ssub.s32 %s17, 2
        // Predicated region
        $region61: #{tpu_custom_call.1} parent=59 // pred_check
          %p986 = pneg %p219
        $region62: #{tpu_custom_call.1} parent=59 // pred_check_branch
          %988 = sbr.rel (%p986) target = $region64
        $region63: #{tpu_custom_call.1} parent=59 // pred_region
          %s989 = sand.u32 %s204, 1
          %s990 = scalar_lea.sflag [#allocation3], %s989
          %s991 = sand.u32 %s204, 1
          %s992 = smul.addr %s991, 16
          %s993 = scalar_lea.vmem [#allocation2], %s992
          %995 = dma.done %s990, 256
        $region64: #{tpu_custom_call.1} parent=59 // pred_fallthru
          _
      $region60: #{tpu_custom_call.1} parent=5 // pred_fallthru
        _
    $region6: #{tpu_custom_call.1} parent=1 // loop_footer
      %s21 = sadd.s32 1, %s17
    $region7: #{tpu_custom_call.1} parent=1 // loop_footer_branch
      %16 = sbr.rel target = $region3
    $region8: #{tpu_custom_call.1} parent=1 // loop_exit
      _
    %996 = vsyncpa [#allocation3], 1
    %s997 = scalar_lea.sflag [#allocation3], 1
    %998 = vsyncpa %s997, 1

</llo_original>
